<compile_context>
chip_gen: v7x
topology: tpu7x:2x2x1
jax: 0.10.0
libtpu: 0.0.40
codegen_flags: <defaults>
</compile_context>

<pallas_src>
import functools

import jax
import jax.numpy as jnp
from jax.experimental import pallas as pl
from jax.experimental.pallas import tpu as pltpu


_N_INFLIGHT = 8  # DMA ring depth (power of two, <= tile_n)


def _trainable_tokens_kernel(src_ref,    # SMEM (N_pad,) int32, scalar prefetch:
                                         #   >= 0 -> base-weight row id
                                         #   <  0 -> -(delta_slot + 1)
                             w_hbm,      # ANY  (V, D)  base embedding weight (HBM)
                             d_hbm,      # ANY  (T, D)  trainable-token deltas (HBM)
                             o_ref,      # VMEM (tile_n, D) output tile (DMA destination)
                             sem,        # DMA semaphores (_N_INFLIGHT,)
                             *, tile_n):
    base = pl.program_id(0) * tile_n

    def start_row(r):
        slot = r & (_N_INFLIGHT - 1)
        s = src_ref[base + r]
        dst = o_ref.at[pl.ds(r, 1), :]

        @pl.when(s >= 0)
        def _():  # plain embedding row: gather from the base weight in HBM
            pltpu.make_async_copy(w_hbm.at[pl.ds(s, 1), :], dst, sem.at[slot]).start()

        @pl.when(s < 0)
        def _():  # trainable token: gather the delta row instead (index_copy merge)
            d = -s - 1
            pltpu.make_async_copy(d_hbm.at[pl.ds(d, 1), :], dst, sem.at[slot]).start()

    def wait_row(r):
        slot = r & (_N_INFLIGHT - 1)
        # Both possible sources transfer the same (1, D) byte count, so a single
        # wait descriptor covers either branch.
        pltpu.make_async_copy(w_hbm.at[pl.ds(0, 1), :],
                              o_ref.at[pl.ds(r, 1), :],
                              sem.at[slot]).wait()

    # Prime the ring with the first _N_INFLIGHT row fetches.
    @pl.loop(0, _N_INFLIGHT)
    def _(r):
        start_row(r)

    # Steady state: retire the oldest in-flight row, launch the next one.
    @pl.loop(0, tile_n - _N_INFLIGHT)
    def _(i):
        wait_row(i)
        start_row(i + _N_INFLIGHT)

    # Drain the remaining in-flight rows before the output tile is written back.
    @pl.loop(tile_n - _N_INFLIGHT, tile_n)
    def _(r):
        wait_row(r)


def trainable_tokens_embedding(x_ids, weight, delta, token_indices, *, tile_n=128):
    """Forward of TrainableTokensLayer wrapping nn.Embedding.

    x_ids:          (B, S) int token ids
    weight:         (V, D) base embedding weight
    delta:          (T, D) trainable token deltas (same dtype as weight)
    token_indices:  (T,)   rows of `weight` replaced by `delta`
    returns:        (B, S, D) in weight dtype
    """
    B, S = x_ids.shape
    V, D = weight.shape
    T, Dd = delta.shape
    assert Dd == D
    assert delta.dtype == weight.dtype
    N = B * S

    # Shrink the tile for tiny inputs; keep it sublane-aligned and >= ring depth.
    tile_n = max(_N_INFLIGHT, min(tile_n, ((N + 7) // 8) * 8))
    tile_n = ((tile_n + 7) // 8) * 8
    assert tile_n % 8 == 0 and tile_n >= _N_INFLIGHT
    N_pad = ((N + tile_n - 1) // tile_n) * tile_n

    # Clamp instead of faulting on out-of-range ids (PyTorch would raise).
    ids = jnp.clip(x_ids.reshape(-1).astype(jnp.int32), 0, V - 1)

    # O(1)-per-row merge: precompute which delta slot (if any) replaces each
    # token.  The Python-ordered where chain preserves last-write-wins for
    # duplicate token_indices, matching index_copy semantics.
    tok = token_indices.astype(jnp.int32)
    slot = jnp.full((N,), -1, dtype=jnp.int32)
    for j in range(T):
        slot = jnp.where(ids == tok[j], j, slot)
    src = jnp.where(slot >= 0, -(slot + 1), ids)
    if N_pad != N:
        src = jnp.pad(src, (0, N_pad - N))  # padded rows gather weight row 0, sliced off

    kernel = functools.partial(_trainable_tokens_kernel, tile_n=tile_n)

    grid_spec = pltpu.PrefetchScalarGridSpec(
        num_scalar_prefetch=1,                      # src -> SMEM
        grid=(N_pad // tile_n,),
        in_specs=[
            pl.BlockSpec(memory_space=pl.ANY),      # weight stays in HBM (row DMAs)
            pl.BlockSpec(memory_space=pl.ANY),      # delta stays in HBM (row DMAs)
        ],
        out_specs=pl.BlockSpec((tile_n, D), lambda i, src: (i, 0)),
        scratch_shapes=[pltpu.SemaphoreType.DMA((_N_INFLIGHT,))],
    )

    itemsize = weight.dtype.itemsize
    cost = pl.CostEstimate(
        flops=0,
        transcendentals=0,
        # Row-gather reads + output writes + per-token source scalars.
        bytes_accessed=int(2 * N_pad * D * itemsize + N_pad * 4),
    )

    out = pl.pallas_call(
        kernel,
        out_shape=jax.ShapeDtypeStruct((N_pad, D), weight.dtype),
        grid_spec=grid_spec,
        compiler_params=pltpu.CompilerParams(
            dimension_semantics=("parallel",),      # tiles shard across TCs (v7x)
        ),
        cost_estimate=cost,
    )(src, weight, delta)

    return out[:N].reshape(B, S, D)


if __name__ == "__main__":
    # Small, deterministic setup consistent with the module:
    #   base_layer = nn.Embedding(V, D);  token_indices = [1, 5, 9, 42]
    #   trainable_tokens_delta has shape (len(token_indices), D)
    B, S = 2, 8          # batch, sequence
    V, D = 64, 32        # vocab size, embedding dim
    token_indices = jnp.array([1, 5, 9, 42], dtype=jnp.int32)
    T = token_indices.shape[0]

    key = jax.random.PRNGKey(0)
    k_w, k_d, k_x = jax.random.split(key, 3)
    weight = jax.random.normal(k_w, (V, D), dtype=jnp.float32)
    # init_weights=False branch: deltas are fresh random values
    delta = jax.random.normal(k_d, (T, D), dtype=jnp.float32)
    x_ids = jax.random.randint(k_x, (B, S), 0, V, dtype=jnp.int32)
    # make sure some trainable tokens actually appear in the input
    x_ids = x_ids.at[0, 0].set(1).at[1, 3].set(42)

    out = trainable_tokens_embedding(x_ids, weight, delta, token_indices)
    out = jax.block_until_ready(out)

    # Pure-JAX reference: index_copy of deltas into W, then embedding gather.
    w_merged = weight.at[token_indices].set(delta)
    ref = w_merged[x_ids]

    assert out.shape == (B, S, D)
    assert out.dtype == weight.dtype
    assert jnp.allclose(out, ref, atol=1e-5, rtol=1e-5)
    print("KERNEL_OK")
</pallas_src>

<mosaic_0001>
module attributes {stable_mosaic.version = 11 : i64} {
  func.func @_trainable_tokens_kernel(%arg0: i32, %arg1: memref<16xi32, #tpu.memory_space<smem>>, %arg2: memref<64x32xf32, #tpu.memory_space<any>>, %arg3: memref<4x32xf32, #tpu.memory_space<any>>, %arg4: memref<16x32xf32, #tpu.memory_space<vmem>>, %arg5: memref<8x!tpu.dma_semaphore, #tpu.memory_space<semaphore_mem>>) attributes {dimension_semantics = [#tpu.dimension_semantics<parallel>], iteration_bounds = array<i64: 1>, scalar_prefetch = 1 : i64, scratch_operands = 1 : i64, tpu.core_type = #tpu.core_type<tc>, window_params = [{}, {}, {transform_indices = @transform_2, window_bounds = array<i64: 16, 32>}]} {
    %c16_i32 = arith.constant 16 : i32
    %0 = arith.muli %arg0, %c16_i32 : i32
    %c0_i32 = arith.constant 0 : i32
    %c8_i32 = arith.constant 8 : i32
    %1 = arith.addi %c0_i32, %c8_i32 : i32
    %c1_i32 = arith.constant 1 : i32
    scf.for %arg6 = %c0_i32 to %1 step %c1_i32  : i32 {
      %c1_i32_9 = arith.constant 1 : i32
      %4 = arith.muli %arg6, %c1_i32_9 : i32
      %c0_i32_10 = arith.constant 0 : i32
      %5 = arith.addi %c0_i32_10, %4 : i32
      %c7_i32 = arith.constant 7 : i32
      %6 = arith.andi %5, %c7_i32 : i32
      %7 = arith.addi %0, %5 : i32
      %8 = arith.index_cast %7 : i32 to index
      %9 = memref.load %arg1[%8] : memref<16xi32, #tpu.memory_space<smem>>
      %c0_i32_11 = arith.constant 0 : i32
      %10 = arith.cmpi sge, %9, %c0_i32_11 : i32
      %11 = arith.extui %10 : i1 to i32
      %c0_i32_12 = arith.constant 0 : i32
      %12 = arith.cmpi ne, %11, %c0_i32_12 : i32
      scf.if %12 {
        %c0_i32_15 = arith.constant 0 : i32
        %16 = tpu.memref_slice %arg2[%9, %c0_i32_15] : memref<64x32xf32, #tpu.memory_space<any>> -> memref<1x32xf32, #tpu.memory_space<any>>
        %c0_i32_16 = arith.constant 0 : i32
        %17 = tpu.memref_slice %arg4[%5, %c0_i32_16] : memref<16x32xf32, #tpu.memory_space<vmem>> -> memref<1x32xf32, #tpu.memory_space<vmem>>
        %18 = tpu.memref_slice %arg5[%6] : memref<8x!tpu.dma_semaphore, #tpu.memory_space<semaphore_mem>> -> memref<1x!tpu.dma_semaphore, #tpu.memory_space<semaphore_mem>>
        %19 = tpu.memref_squeeze %18 : memref<1x!tpu.dma_semaphore, #tpu.memory_space<semaphore_mem>> -> memref<!tpu.dma_semaphore, #tpu.memory_space<semaphore_mem>>
        tpu.enqueue_dma source(%16 : memref<1x32xf32, #tpu.memory_space<any>>) target(%17 : memref<1x32xf32, #tpu.memory_space<vmem>>) target_semaphore(%19 : memref<!tpu.dma_semaphore, #tpu.memory_space<semaphore_mem>>)
      } else {
      }
      %c0_i32_13 = arith.constant 0 : i32
      %13 = arith.cmpi slt, %9, %c0_i32_13 : i32
      %14 = arith.extui %13 : i1 to i32
      %c0_i32_14 = arith.constant 0 : i32
      %15 = arith.cmpi ne, %14, %c0_i32_14 : i32
      scf.if %15 {
        %c0_i32_15 = arith.constant 0 : i32
        %16 = arith.subi %c0_i32_15, %9 : i32
        %c1_i32_16 = arith.constant 1 : i32
        %17 = arith.subi %16, %c1_i32_16 : i32
        %c0_i32_17 = arith.constant 0 : i32
        %18 = tpu.memref_slice %arg3[%17, %c0_i32_17] : memref<4x32xf32, #tpu.memory_space<any>> -> memref<1x32xf32, #tpu.memory_space<any>>
        %c0_i32_18 = arith.constant 0 : i32
        %19 = tpu.memref_slice %arg4[%5, %c0_i32_18] : memref<16x32xf32, #tpu.memory_space<vmem>> -> memref<1x32xf32, #tpu.memory_space<vmem>>
        %20 = tpu.memref_slice %arg5[%6] : memref<8x!tpu.dma_semaphore, #tpu.memory_space<semaphore_mem>> -> memref<1x!tpu.dma_semaphore, #tpu.memory_space<semaphore_mem>>
        %21 = tpu.memref_squeeze %20 : memref<1x!tpu.dma_semaphore, #tpu.memory_space<semaphore_mem>> -> memref<!tpu.dma_semaphore, #tpu.memory_space<semaphore_mem>>
        tpu.enqueue_dma source(%18 : memref<1x32xf32, #tpu.memory_space<any>>) target(%19 : memref<1x32xf32, #tpu.memory_space<vmem>>) target_semaphore(%21 : memref<!tpu.dma_semaphore, #tpu.memory_space<semaphore_mem>>)
      } else {
      }
    }
    %c8_i32_0 = arith.constant 8 : i32
    %c0_i32_1 = arith.constant 0 : i32
    %c8_i32_2 = arith.constant 8 : i32
    %2 = arith.addi %c0_i32_1, %c8_i32_2 : i32
    %c1_i32_3 = arith.constant 1 : i32
    scf.for %arg6 = %c0_i32_1 to %2 step %c1_i32_3  : i32 {
      %c1_i32_9 = arith.constant 1 : i32
      %4 = arith.muli %arg6, %c1_i32_9 : i32
      %c0_i32_10 = arith.constant 0 : i32
      %5 = arith.addi %c0_i32_10, %4 : i32
      %c7_i32 = arith.constant 7 : i32
      %6 = arith.andi %5, %c7_i32 : i32
      %c0_i32_11 = arith.constant 0 : i32
      %c0_i32_12 = arith.constant 0 : i32
      %7 = tpu.memref_slice %arg2[%c0_i32_11, %c0_i32_12] : memref<64x32xf32, #tpu.memory_space<any>> -> memref<1x32xf32, #tpu.memory_space<any>>
      %c0_i32_13 = arith.constant 0 : i32
      %8 = tpu.memref_slice %arg4[%5, %c0_i32_13] : memref<16x32xf32, #tpu.memory_space<vmem>> -> memref<1x32xf32, #tpu.memory_space<vmem>>
      %9 = tpu.memref_slice %arg5[%6] : memref<8x!tpu.dma_semaphore, #tpu.memory_space<semaphore_mem>> -> memref<1x!tpu.dma_semaphore, #tpu.memory_space<semaphore_mem>>
      %10 = tpu.memref_squeeze %9 : memref<1x!tpu.dma_semaphore, #tpu.memory_space<semaphore_mem>> -> memref<!tpu.dma_semaphore, #tpu.memory_space<semaphore_mem>>
      tpu.wait_dma2 semaphore(%10 : memref<!tpu.dma_semaphore, #tpu.memory_space<semaphore_mem>>) src(%7 : memref<1x32xf32, #tpu.memory_space<any>>) dst(%8 : memref<1x32xf32, #tpu.memory_space<vmem>>)
      %c8_i32_14 = arith.constant 8 : i32
      %11 = arith.addi %5, %c8_i32_14 : i32
      %c7_i32_15 = arith.constant 7 : i32
      %12 = arith.andi %11, %c7_i32_15 : i32
      %13 = arith.addi %0, %11 : i32
      %14 = arith.index_cast %13 : i32 to index
      %15 = memref.load %arg1[%14] : memref<16xi32, #tpu.memory_space<smem>>
      %c0_i32_16 = arith.constant 0 : i32
      %16 = arith.cmpi sge, %15, %c0_i32_16 : i32
      %17 = arith.extui %16 : i1 to i32
      %c0_i32_17 = arith.constant 0 : i32
      %18 = arith.cmpi ne, %17, %c0_i32_17 : i32
      scf.if %18 {
        %c0_i32_20 = arith.constant 0 : i32
        %22 = tpu.memref_slice %arg2[%15, %c0_i32_20] : memref<64x32xf32, #tpu.memory_space<any>> -> memref<1x32xf32, #tpu.memory_space<any>>
        %c0_i32_21 = arith.constant 0 : i32
        %23 = tpu.memref_slice %arg4[%11, %c0_i32_21] : memref<16x32xf32, #tpu.memory_space<vmem>> -> memref<1x32xf32, #tpu.memory_space<vmem>>
        %24 = tpu.memref_slice %arg5[%12] : memref<8x!tpu.dma_semaphore, #tpu.memory_space<semaphore_mem>> -> memref<1x!tpu.dma_semaphore, #tpu.memory_space<semaphore_mem>>
        %25 = tpu.memref_squeeze %24 : memref<1x!tpu.dma_semaphore, #tpu.memory_space<semaphore_mem>> -> memref<!tpu.dma_semaphore, #tpu.memory_space<semaphore_mem>>
        tpu.enqueue_dma source(%22 : memref<1x32xf32, #tpu.memory_space<any>>) target(%23 : memref<1x32xf32, #tpu.memory_space<vmem>>) target_semaphore(%25 : memref<!tpu.dma_semaphore, #tpu.memory_space<semaphore_mem>>)
      } else {
      }
      %c0_i32_18 = arith.constant 0 : i32
      %19 = arith.cmpi slt, %15, %c0_i32_18 : i32
      %20 = arith.extui %19 : i1 to i32
      %c0_i32_19 = arith.constant 0 : i32
      %21 = arith.cmpi ne, %20, %c0_i32_19 : i32
      scf.if %21 {
        %c0_i32_20 = arith.constant 0 : i32
        %22 = arith.subi %c0_i32_20, %15 : i32
        %c1_i32_21 = arith.constant 1 : i32
        %23 = arith.subi %22, %c1_i32_21 : i32
        %c0_i32_22 = arith.constant 0 : i32
        %24 = tpu.memref_slice %arg3[%23, %c0_i32_22] : memref<4x32xf32, #tpu.memory_space<any>> -> memref<1x32xf32, #tpu.memory_space<any>>
        %c0_i32_23 = arith.constant 0 : i32
        %25 = tpu.memref_slice %arg4[%11, %c0_i32_23] : memref<16x32xf32, #tpu.memory_space<vmem>> -> memref<1x32xf32, #tpu.memory_space<vmem>>
        %26 = tpu.memref_slice %arg5[%12] : memref<8x!tpu.dma_semaphore, #tpu.memory_space<semaphore_mem>> -> memref<1x!tpu.dma_semaphore, #tpu.memory_space<semaphore_mem>>
        %27 = tpu.memref_squeeze %26 : memref<1x!tpu.dma_semaphore, #tpu.memory_space<semaphore_mem>> -> memref<!tpu.dma_semaphore, #tpu.memory_space<semaphore_mem>>
        tpu.enqueue_dma source(%24 : memref<1x32xf32, #tpu.memory_space<any>>) target(%25 : memref<1x32xf32, #tpu.memory_space<vmem>>) target_semaphore(%27 : memref<!tpu.dma_semaphore, #tpu.memory_space<semaphore_mem>>)
      } else {
      }
    }
    %c8_i32_4 = arith.constant 8 : i32
    %c0_i32_5 = arith.constant 0 : i32
    %c8_i32_6 = arith.constant 8 : i32
    %3 = arith.addi %c0_i32_5, %c8_i32_6 : i32
    %c1_i32_7 = arith.constant 1 : i32
    scf.for %arg6 = %c0_i32_5 to %3 step %c1_i32_7  : i32 {
      %c1_i32_9 = arith.constant 1 : i32
      %4 = arith.muli %arg6, %c1_i32_9 : i32
      %c8_i32_10 = arith.constant 8 : i32
      %5 = arith.addi %c8_i32_10, %4 : i32
      %c7_i32 = arith.constant 7 : i32
      %6 = arith.andi %5, %c7_i32 : i32
      %c0_i32_11 = arith.constant 0 : i32
      %c0_i32_12 = arith.constant 0 : i32
      %7 = tpu.memref_slice %arg2[%c0_i32_11, %c0_i32_12] : memref<64x32xf32, #tpu.memory_space<any>> -> memref<1x32xf32, #tpu.memory_space<any>>
      %c0_i32_13 = arith.constant 0 : i32
      %8 = tpu.memref_slice %arg4[%5, %c0_i32_13] : memref<16x32xf32, #tpu.memory_space<vmem>> -> memref<1x32xf32, #tpu.memory_space<vmem>>
      %9 = tpu.memref_slice %arg5[%6] : memref<8x!tpu.dma_semaphore, #tpu.memory_space<semaphore_mem>> -> memref<1x!tpu.dma_semaphore, #tpu.memory_space<semaphore_mem>>
      %10 = tpu.memref_squeeze %9 : memref<1x!tpu.dma_semaphore, #tpu.memory_space<semaphore_mem>> -> memref<!tpu.dma_semaphore, #tpu.memory_space<semaphore_mem>>
      tpu.wait_dma2 semaphore(%10 : memref<!tpu.dma_semaphore, #tpu.memory_space<semaphore_mem>>) src(%7 : memref<1x32xf32, #tpu.memory_space<any>>) dst(%8 : memref<1x32xf32, #tpu.memory_space<vmem>>)
    }
    %c8_i32_8 = arith.constant 8 : i32
    return
  }
  func.func @transform_2(%arg0: i32, %arg1: memref<16xi32, #tpu.memory_space<smem>>) -> (i32, i32) {
    %c0_i32 = arith.constant 0 : i32
    %c0_i32_0 = arith.constant 0 : i32
    return %arg0, %c0_i32 : i32, i32
  }
}

</mosaic_0001>

<llo_original>
// kernel: tpu_custom_call.1
$region0: #{tpu_custom_call.1}
  #allocation0 [shape = 'u32[]', space=smem, size = 0x4, offset = 0x4, fixed_abs, tag = 'smem constant byte address 0x4 - core index']
  #allocation1 [shape = 'u32[144,128]{1,0:T(1,128)}', space=vmem, size = 0x12000, scoped, tag = 'internal scratch']
  #allocation2 [shape = 's32[8]{0}', space=sflag, size = 0x20, scoped, tag = 'scratch operand']
  #allocation3 [shape = 's32[1]{0}', space=sflag, size = 0x4, scoped, tag = 'scoped memory for tpu_custom_call.1']
  #allocation4 [shape = 'u8[512]{0}', space=smem, size = 0x200, scoped, tag = 'prefetched SMEM operand 0']
  #allocation7 [shape = 's32[]', space=sflag, size = 0x4, offset = 0, fixed_abs, tag = 'sflag constant byte address 0x0 - dummy sync flag']
  #allocation8 [shape = 's32[]', space=sflag, size = 0x4, offset = 0, fixed_abs, tag = 'sflag constant byte address 0x0 - dummy sync flag']
  #allocation9 [shape = 's32[]', space=sflag, size = 0x4, offset = 0, fixed_abs, tag = 'sflag constant byte address 0x0 - dummy sync flag']
  #allocation10 [shape = 's32[]', space=sflag, size = 0x4, offset = 0, fixed_abs, tag = 'sflag constant byte address 0x0 - dummy sync flag']
  %s0 = inlined_call_operand.vmem [shape: s32[16], index: 0, kind: input, shape index: {}]
  %s1 = inlined_call_operand.vmem [shape: f32[64,32], index: 1, kind: input, shape index: {}]
  %s2 = inlined_call_operand.vmem [shape: f32[4,32], index: 2, kind: input, shape index: {}]
  %s3 = inlined_call_operand.hbm [shape: f32[16,32], index: 3, kind: output, shape index: {}]
  %s4 = sld [smem:[#allocation0]]
  $region167: #{tpu_custom_call.1} parent=0
    _
  %s6 = ssub.s32 1, %s4
  %s7 = scalar_select 0, %s6, %s4
  %s8 = sshll.u32 %s0, 4
  %s9 = int_to_ptr.vmem [resolvable:$true] %s8
  %11 = dma.vmem_to_smem %s9, 16, [#allocation4], [#allocation3]
  %12 = dma.done [#allocation3], 16
  %13 = sfence
  $region1: #{tpu_custom_call.1} parent=0
    #allocation5 [shape = 'u8[8192]{0}', space=vmem, size = 0x2000, scoped, tag = 'output window, operand 0, single buffered']
    #allocation6 [shape = 's32[1]{0}', space=sflag, size = 0x4, scoped, tag = 'scoped memory for tpu_custom_call.1']
    %14 = vsyncpa [#allocation6], 0
    %s15 = smul.u32 0, 16
    loop: start=0, step=1, limit=8
    $region2: #{tpu_custom_call.1} parent=1 // loop_pre_header
      _
    $region3: #{tpu_custom_call.1} parent=1 // loop_header
      %s17 = sphi 0, %s21
      %p18 = scmp.ge.s32.totalorder %s17, 8
    $region4: #{tpu_custom_call.1} parent=1 // loop_header_branch
      %20 = sbr.rel (%p18) target = $region8
    $region5: #{tpu_custom_call.1} parent=1 // loop_body
      %s22 = sand.u32 %s17, 7
      %s23 = sadd.s32 %s15, %s17
      %s24 = sld [smem:[#allocation4 + %s23]]
      %p25 = scmp.ge.s32.totalorder %s24, 0
      // Predicated region
      $region9: #{tpu_custom_call.1} parent=5 // pred_check
        %p26 = pneg %p25
      $region10: #{tpu_custom_call.1} parent=5 // pred_check_branch
        %28 = sbr.rel (%p26) target = $region12
      $region11: #{tpu_custom_call.1} parent=5 // pred_region
        %s29 = scalar_lea.vmem %s1, %s24
        %s30 = scalar_lea.vmem [#allocation5], %s17
        %s31 = scalar_lea.sflag [#allocation2], %s22
        %p33 = scmp.lt.u32.totalorder 1, 8
        %p34 = pneg %p33
        // Predicated region
        $region13: #{tpu_custom_call.1} parent=11 // pred_check
          _
        $region14: #{tpu_custom_call.1} parent=11 // pred_check_branch
          %36 = sbr.rel (%p33) target = $region16
        $region15: #{tpu_custom_call.1} parent=11 // pred_region
          %s51 = sand.u32 1, 7
          %p52 = scmp.eq.s32.totalorder %s51, 0
          %p53 = pneg %p52
          // Predicated region
          $region28: #{tpu_custom_call.1} parent=15 // pred_check
            _
          $region29: #{tpu_custom_call.1} parent=15 // pred_check_branch
            %55 = sbr.rel (%p52) target = $region31
          $region30: #{tpu_custom_call.1} parent=15 // pred_region
            %s56 = sand.u32 1, 7
            %s57 = ssub.s32 1, %s56
            %s58 = scalar_lea.vmem %s29, %s57
            %s59 = ssub.s32 1, %s56
            %s60 = scalar_lea.vmem %s30, %s59 [#allocation5]
            %s61 = sshllo.u32 0, %s56
            loop: start=0, step=1, limit=1
            $region32: #{tpu_custom_call.1} parent=30 // loop_pre_header
              _
            $region33: #{tpu_custom_call.1} parent=30 // loop_header
              %s63 = sphi 0, %s67
              %p64 = scmp.ge.s32.totalorder %s63, 1
              %s68 = sphi %s58, %s58
              %s69 = sphi %s60, %s60
            $region34: #{tpu_custom_call.1} parent=30 // loop_header_branch
              %66 = sbr.rel (%p64) target = $region38
            $region35: #{tpu_custom_call.1} parent=30 // loop_body
              %v70 = vld [vmem:[%s68] sm:%s61]
              %71 = vst [vmem:[%s69] sm:%s61] %v70
            $region36: #{tpu_custom_call.1} parent=30 // loop_footer
              %s67 = sadd.s32 1, %s63
            $region37: #{tpu_custom_call.1} parent=30 // loop_footer_branch
              %62 = sbr.rel target = $region33
            $region38: #{tpu_custom_call.1} parent=30 // loop_exit
              _
          $region31: #{tpu_custom_call.1} parent=15 // pred_fallthru
            _
        $region16: #{tpu_custom_call.1} parent=11 // pred_fallthru
          _
        // Predicated region
        $region17: #{tpu_custom_call.1} parent=11 // pred_check
          %p37 = pneg %p33
        $region18: #{tpu_custom_call.1} parent=11 // pred_check_branch
          %39 = sbr.rel (%p37) target = $region20
        $region19: #{tpu_custom_call.1} parent=11 // pred_region
          %s40 = sshllo.u32 0, 1
          loop: start=0, step=1, limit=1
          $region21: #{tpu_custom_call.1} parent=19 // loop_pre_header
            _
          $region22: #{tpu_custom_call.1} parent=19 // loop_header
            %s42 = sphi 0, %s46
            %p43 = scmp.ge.s32.totalorder %s42, 1
            %s47 = sphi %s29, %s29
            %s48 = sphi %s30, %s30
          $region23: #{tpu_custom_call.1} parent=19 // loop_header_branch
            %45 = sbr.rel (%p43) target = $region27
          $region24: #{tpu_custom_call.1} parent=19 // loop_body
            %v49 = vld [vmem:[%s47] sm:%s40]
            %50 = vst [vmem:[%s48] sm:%s40] %v49
          $region25: #{tpu_custom_call.1} parent=19 // loop_footer
            %s46 = sadd.s32 1, %s42
          $region26: #{tpu_custom_call.1} parent=19 // loop_footer_branch
            %41 = sbr.rel target = $region22
          $region27: #{tpu_custom_call.1} parent=19 // loop_exit
            _
        $region20: #{tpu_custom_call.1} parent=11 // pred_fallthru
          _
        // Predicated region
        $region39: #{tpu_custom_call.1} parent=11 // pred_check
          _
        $region40: #{tpu_custom_call.1} parent=11 // pred_check_branch
          %74 = sbr.rel (0) target = $region42
        $region41: #{tpu_custom_call.1} parent=11 // pred_region
          %75 = vsyncadd %s31, 16
        $region42: #{tpu_custom_call.1} parent=11 // pred_fallthru
          _
      $region12: #{tpu_custom_call.1} parent=5 // pred_fallthru
        _
      %p76 = scmp.lt.s32.totalorder %s24, 0
      // Predicated region
      $region43: #{tpu_custom_call.1} parent=5 // pred_check
        %p77 = pneg %p76
      $region44: #{tpu_custom_call.1} parent=5 // pred_check_branch
        %79 = sbr.rel (%p77) target = $region46
      $region45: #{tpu_custom_call.1} parent=5 // pred_region
        %s80 = ssub.s32 4294967295, %s24
        %s81 = scalar_lea.vmem %s2, %s80
        %s82 = scalar_lea.vmem [#allocation5], %s17
        %s83 = scalar_lea.sflag [#allocation2], %s22
        %p85 = scmp.lt.u32.totalorder 1, 8
        %p86 = pneg %p85
        // Predicated region
        $region47: #{tpu_custom_call.1} parent=45 // pred_check
          _
        $region48: #{tpu_custom_call.1} parent=45 // pred_check_branch
          %88 = sbr.rel (%p85) target = $region50
        $region49: #{tpu_custom_call.1} parent=45 // pred_region
          %s103 = sand.u32 1, 7
          %p104 = scmp.eq.s32.totalorder %s103, 0
          %p105 = pneg %p104
          // Predicated region
          $region62: #{tpu_custom_call.1} parent=49 // pred_check
            _
          $region63: #{tpu_custom_call.1} parent=49 // pred_check_branch
            %107 = sbr.rel (%p104) target = $region65
          $region64: #{tpu_custom_call.1} parent=49 // pred_region
            %s108 = sand.u32 1, 7
            %s109 = ssub.s32 1, %s108
            %s110 = scalar_lea.vmem %s81, %s109
            %s111 = ssub.s32 1, %s108
            %s112 = scalar_lea.vmem %s82, %s111 [#allocation5]
            %s113 = sshllo.u32 0, %s108
            loop: start=0, step=1, limit=1
            $region66: #{tpu_custom_call.1} parent=64 // loop_pre_header
              _
            $region67: #{tpu_custom_call.1} parent=64 // loop_header
              %s115 = sphi 0, %s119
              %p116 = scmp.ge.s32.totalorder %s115, 1
              %s120 = sphi %s110, %s110
              %s121 = sphi %s112, %s112
            $region68: #{tpu_custom_call.1} parent=64 // loop_header_branch
              %118 = sbr.rel (%p116) target = $region72
            $region69: #{tpu_custom_call.1} parent=64 // loop_body
              %v122 = vld [vmem:[%s120] sm:%s113]
              %123 = vst [vmem:[%s121] sm:%s113] %v122
            $region70: #{tpu_custom_call.1} parent=64 // loop_footer
              %s119 = sadd.s32 1, %s115
            $region71: #{tpu_custom_call.1} parent=64 // loop_footer_branch
              %114 = sbr.rel target = $region67
            $region72: #{tpu_custom_call.1} parent=64 // loop_exit
              _
          $region65: #{tpu_custom_call.1} parent=49 // pred_fallthru
            _
        $region50: #{tpu_custom_call.1} parent=45 // pred_fallthru
          _
        // Predicated region
        $region51: #{tpu_custom_call.1} parent=45 // pred_check
          %p89 = pneg %p85
        $region52: #{tpu_custom_call.1} parent=45 // pred_check_branch
          %91 = sbr.rel (%p89) target = $region54
        $region53: #{tpu_custom_call.1} parent=45 // pred_region
          %s92 = sshllo.u32 0, 1
          loop: start=0, step=1, limit=1
          $region55: #{tpu_custom_call.1} parent=53 // loop_pre_header
            _
          $region56: #{tpu_custom_call.1} parent=53 // loop_header
            %s94 = sphi 0, %s98
            %p95 = scmp.ge.s32.totalorder %s94, 1
            %s99 = sphi %s81, %s81
            %s100 = sphi %s82, %s82
          $region57: #{tpu_custom_call.1} parent=53 // loop_header_branch
            %97 = sbr.rel (%p95) target = $region61
          $region58: #{tpu_custom_call.1} parent=53 // loop_body
            %v101 = vld [vmem:[%s99] sm:%s92]
            %102 = vst [vmem:[%s100] sm:%s92] %v101
          $region59: #{tpu_custom_call.1} parent=53 // loop_footer
            %s98 = sadd.s32 1, %s94
          $region60: #{tpu_custom_call.1} parent=53 // loop_footer_branch
            %93 = sbr.rel target = $region56
          $region61: #{tpu_custom_call.1} parent=53 // loop_exit
            _
        $region54: #{tpu_custom_call.1} parent=45 // pred_fallthru
          _
        // Predicated region
        $region73: #{tpu_custom_call.1} parent=45 // pred_check
          _
        $region74: #{tpu_custom_call.1} parent=45 // pred_check_branch
          %126 = sbr.rel (0) target = $region76
        $region75: #{tpu_custom_call.1} parent=45 // pred_region
          %127 = vsyncadd %s83, 16
        $region76: #{tpu_custom_call.1} parent=45 // pred_fallthru
          _
      $region46: #{tpu_custom_call.1} parent=5 // pred_fallthru
        _
    $region6: #{tpu_custom_call.1} parent=1 // loop_footer
      %s21 = sadd.s32 1, %s17
    $region7: #{tpu_custom_call.1} parent=1 // loop_footer_branch
      %16 = sbr.rel target = $region3
    $region8: #{tpu_custom_call.1} parent=1 // loop_exit
      _
    loop: start=0, step=1, limit=8
    $region77: #{tpu_custom_call.1} parent=1 // loop_pre_header
      _
    $region78: #{tpu_custom_call.1} parent=1 // loop_header
      %s129 = sphi 0, %s133
      %p130 = scmp.ge.s32.totalorder %s129, 8
    $region79: #{tpu_custom_call.1} parent=1 // loop_header_branch
      %132 = sbr.rel (%p130) target = $region83
    $region80: #{tpu_custom_call.1} parent=1 // loop_body
      %s134 = sand.u32 %s129, 7
      %s135 = scalar_lea.sflag [#allocation2], %s134
      %s136 = smul.u32 1, 1
      %s137 = sshll.u32 %s136, 4
      %138 = dma.done %s135, %s137
      %s139 = sadd.s32 %s129, 8
      %s140 = sand.u32 %s139, 7
      %s141 = sadd.s32 %s15, %s139
      %s142 = sld [smem:[#allocation4 + %s141]]
      %p143 = scmp.ge.s32.totalorder %s142, 0
      // Predicated region
      $region84: #{tpu_custom_call.1} parent=80 // pred_check
        %p144 = pneg %p143
      $region85: #{tpu_custom_call.1} parent=80 // pred_check_branch
        %146 = sbr.rel (%p144) target = $region87
      $region86: #{tpu_custom_call.1} parent=80 // pred_region
        %s147 = scalar_lea.vmem %s1, %s142
        %s148 = scalar_lea.vmem [#allocation5], %s139
        %s149 = scalar_lea.sflag [#allocation2], %s140
        %p151 = scmp.lt.u32.totalorder 1, 8
        %p152 = pneg %p151
        // Predicated region
        $region88: #{tpu_custom_call.1} parent=86 // pred_check
          _
        $region89: #{tpu_custom_call.1} parent=86 // pred_check_branch
          %154 = sbr.rel (%p151) target = $region91
        $region90: #{tpu_custom_call.1} parent=86 // pred_region
          %s169 = sand.u32 1, 7
          %p170 = scmp.eq.s32.totalorder %s169, 0
          %p171 = pneg %p170
          // Predicated region
          $region103: #{tpu_custom_call.1} parent=90 // pred_check
            _
          $region104: #{tpu_custom_call.1} parent=90 // pred_check_branch
            %173 = sbr.rel (%p170) target = $region106
          $region105: #{tpu_custom_call.1} parent=90 // pred_region
            %s174 = sand.u32 1, 7
            %s175 = ssub.s32 1, %s174
            %s176 = scalar_lea.vmem %s147, %s175
            %s177 = ssub.s32 1, %s174
            %s178 = scalar_lea.vmem %s148, %s177 [#allocation5]
            %s179 = sshllo.u32 0, %s174
            loop: start=0, step=1, limit=1
            $region107: #{tpu_custom_call.1} parent=105 // loop_pre_header
              _
            $region108: #{tpu_custom_call.1} parent=105 // loop_header
              %s181 = sphi 0, %s185
              %p182 = scmp.ge.s32.totalorder %s181, 1
              %s186 = sphi %s176, %s176
              %s187 = sphi %s178, %s178
            $region109: #{tpu_custom_call.1} parent=105 // loop_header_branch
              %184 = sbr.rel (%p182) target = $region113
            $region110: #{tpu_custom_call.1} parent=105 // loop_body
              %v188 = vld [vmem:[%s186] sm:%s179]
              %189 = vst [vmem:[%s187] sm:%s179] %v188
            $region111: #{tpu_custom_call.1} parent=105 // loop_footer
              %s185 = sadd.s32 1, %s181
            $region112: #{tpu_custom_call.1} parent=105 // loop_footer_branch
              %180 = sbr.rel target = $region108
            $region113: #{tpu_custom_call.1} parent=105 // loop_exit
              _
          $region106: #{tpu_custom_call.1} parent=90 // pred_fallthru
            _
        $region91: #{tpu_custom_call.1} parent=86 // pred_fallthru
          _
        // Predicated region
        $region92: #{tpu_custom_call.1} parent=86 // pred_check
          %p155 = pneg %p151
        $region93: #{tpu_custom_call.1} parent=86 // pred_check_branch
          %157 = sbr.rel (%p155) target = $region95
        $region94: #{tpu_custom_call.1} parent=86 // pred_region
          %s158 = sshllo.u32 0, 1
          loop: start=0, step=1, limit=1
          $region96: #{tpu_custom_call.1} parent=94 // loop_pre_header
            _
          $region97: #{tpu_custom_call.1} parent=94 // loop_header
            %s160 = sphi 0, %s164
            %p161 = scmp.ge.s32.totalorder %s160, 1
            %s165 = sphi %s147, %s147
            %s166 = sphi %s148, %s148
          $region98: #{tpu_custom_call.1} parent=94 // loop_header_branch
            %163 = sbr.rel (%p161) target = $region102
          $region99: #{tpu_custom_call.1} parent=94 // loop_body
            %v167 = vld [vmem:[%s165] sm:%s158]
            %168 = vst [vmem:[%s166] sm:%s158] %v167
          $region100: #{tpu_custom_call.1} parent=94 // loop_footer
            %s164 = sadd.s32 1, %s160
          $region101: #{tpu_custom_call.1} parent=94 // loop_footer_branch
            %159 = sbr.rel target = $region97
          $region102: #{tpu_custom_call.1} parent=94 // loop_exit
            _
        $region95: #{tpu_custom_call.1} parent=86 // pred_fallthru
          _
        // Predicated region
        $region114: #{tpu_custom_call.1} parent=86 // pred_check
          _
        $region115: #{tpu_custom_call.1} parent=86 // pred_check_branch
          %192 = sbr.rel (0) target = $region117
        $region116: #{tpu_custom_call.1} parent=86 // pred_region
          %193 = vsyncadd %s149, 16
        $region117: #{tpu_custom_call.1} parent=86 // pred_fallthru
          _
      $region87: #{tpu_custom_call.1} parent=80 // pred_fallthru
        _
      %p194 = scmp.lt.s32.totalorder %s142, 0
      // Predicated region
      $region118: #{tpu_custom_call.1} parent=80 // pred_check
        %p195 = pneg %p194
      $region119: #{tpu_custom_call.1} parent=80 // pred_check_branch
        %197 = sbr.rel (%p195) target = $region121
      $region120: #{tpu_custom_call.1} parent=80 // pred_region
        %s198 = ssub.s32 4294967295, %s142
        %s199 = scalar_lea.vmem %s2, %s198
        %s200 = scalar_lea.vmem [#allocation5], %s139
        %s201 = scalar_lea.sflag [#allocation2], %s140
        %p203 = scmp.lt.u32.totalorder 1, 8
        %p204 = pneg %p203
        // Predicated region
        $region122: #{tpu_custom_call.1} parent=120 // pred_check
          _
        $region123: #{tpu_custom_call.1} parent=120 // pred_check_branch
          %206 = sbr.rel (%p203) target = $region125
        $region124: #{tpu_custom_call.1} parent=120 // pred_region
          %s221 = sand.u32 1, 7
          %p222 = scmp.eq.s32.totalorder %s221, 0
          %p223 = pneg %p222
          // Predicated region
          $region137: #{tpu_custom_call.1} parent=124 // pred_check
            _
          $region138: #{tpu_custom_call.1} parent=124 // pred_check_branch
            %225 = sbr.rel (%p222) target = $region140
          $region139: #{tpu_custom_call.1} parent=124 // pred_region
            %s226 = sand.u32 1, 7
            %s227 = ssub.s32 1, %s226
            %s228 = scalar_lea.vmem %s199, %s227
            %s229 = ssub.s32 1, %s226
            %s230 = scalar_lea.vmem %s200, %s229 [#allocation5]
            %s231 = sshllo.u32 0, %s226
            loop: start=0, step=1, limit=1
            $region141: #{tpu_custom_call.1} parent=139 // loop_pre_header
              _
            $region142: #{tpu_custom_call.1} parent=139 // loop_header
              %s233 = sphi 0, %s237
              %p234 = scmp.ge.s32.totalorder %s233, 1
              %s238 = sphi %s228, %s228
              %s239 = sphi %s230, %s230
            $region143: #{tpu_custom_call.1} parent=139 // loop_header_branch
              %236 = sbr.rel (%p234) target = $region147
            $region144: #{tpu_custom_call.1} parent=139 // loop_body
              %v240 = vld [vmem:[%s238] sm:%s231]
              %241 = vst [vmem:[%s239] sm:%s231] %v240
            $region145: #{tpu_custom_call.1} parent=139 // loop_footer
              %s237 = sadd.s32 1, %s233
            $region146: #{tpu_custom_call.1} parent=139 // loop_footer_branch
              %232 = sbr.rel target = $region142
            $region147: #{tpu_custom_call.1} parent=139 // loop_exit
              _
          $region140: #{tpu_custom_call.1} parent=124 // pred_fallthru
            _
        $region125: #{tpu_custom_call.1} parent=120 // pred_fallthru
          _
        // Predicated region
        $region126: #{tpu_custom_call.1} parent=120 // pred_check
          %p207 = pneg %p203
        $region127: #{tpu_custom_call.1} parent=120 // pred_check_branch
          %209 = sbr.rel (%p207) target = $region129
        $region128: #{tpu_custom_call.1} parent=120 // pred_region
          %s210 = sshllo.u32 0, 1
          loop: start=0, step=1, limit=1
          $region130: #{tpu_custom_call.1} parent=128 // loop_pre_header
            _
          $region131: #{tpu_custom_call.1} parent=128 // loop_header
            %s212 = sphi 0, %s216
            %p213 = scmp.ge.s32.totalorder %s212, 1
            %s217 = sphi %s199, %s199
            %s218 = sphi %s200, %s200
          $region132: #{tpu_custom_call.1} parent=128 // loop_header_branch
            %215 = sbr.rel (%p213) target = $region136
          $region133: #{tpu_custom_call.1} parent=128 // loop_body
            %v219 = vld [vmem:[%s217] sm:%s210]
            %220 = vst [vmem:[%s218] sm:%s210] %v219
          $region134: #{tpu_custom_call.1} parent=128 // loop_footer
            %s216 = sadd.s32 1, %s212
          $region135: #{tpu_custom_call.1} parent=128 // loop_footer_branch
            %211 = sbr.rel target = $region131
          $region136: #{tpu_custom_call.1} parent=128 // loop_exit
            _
        $region129: #{tpu_custom_call.1} parent=120 // pred_fallthru
          _
        // Predicated region
        $region148: #{tpu_custom_call.1} parent=120 // pred_check
          _
        $region149: #{tpu_custom_call.1} parent=120 // pred_check_branch
          %244 = sbr.rel (0) target = $region151
        $region150: #{tpu_custom_call.1} parent=120 // pred_region
          %245 = vsyncadd %s201, 16
        $region151: #{tpu_custom_call.1} parent=120 // pred_fallthru
          _
      $region121: #{tpu_custom_call.1} parent=80 // pred_fallthru
        _
    $region81: #{tpu_custom_call.1} parent=1 // loop_footer
      %s133 = sadd.s32 1, %s129
    $region82: #{tpu_custom_call.1} parent=1 // loop_footer_branch
      %128 = sbr.rel target = $region78
    $region83: #{tpu_custom_call.1} parent=1 // loop_exit
      _
    loop: start=0, step=1, limit=8
    $region152: #{tpu_custom_call.1} parent=1 // loop_pre_header
      _
    $region153: #{tpu_custom_call.1} parent=1 // loop_header
      %s247 = sphi 0, %s251
      %p248 = scmp.ge.s32.totalorder %s247, 8
    $region154: #{tpu_custom_call.1} parent=1 // loop_header_branch
      %250 = sbr.rel (%p248) target = $region158
    $region155: #{tpu_custom_call.1} parent=1 // loop_body
      %s252 = sadd.s32 %s247, 8
      %s253 = sand.u32 %s252, 7
      %s254 = scalar_lea.sflag [#allocation2], %s253
      %s255 = smul.u32 1, 1
      %s256 = sshll.u32 %s255, 4
      %257 = dma.done %s254, %s256
    $region156: #{tpu_custom_call.1} parent=1 // loop_footer
      %s251 = sadd.s32 1, %s247
    $region157: #{tpu_custom_call.1} parent=1 // loop_footer_branch
      %246 = sbr.rel target = $region153
    $region158: #{tpu_custom_call.1} parent=1 // loop_exit
      _
    // Predicated region
    $region159: #{tpu_custom_call.1} parent=1 // pred_check
      _
    $region160: #{tpu_custom_call.1} parent=1 // pred_check_branch
      %259 = sbr.rel (0) target = $region162
    $region161: #{tpu_custom_call.1} parent=1 // pred_region
      %s261 = ssub.s32 256, 256
      %262 = vsyncadd [#allocation6], %s261
      %s263 = sshll.u32 [#allocation5], 4
      %s264 = int_to_ptr.vmem [resolvable:$true] %s263
      %269 = dma.vmem_to_hbm [thread:$0]  %s264, 256, %s3, [#allocation6], 128, 128, 8
    $region162: #{tpu_custom_call.1} parent=1 // pred_fallthru
      _
    // Predicated region
    $region163: #{tpu_custom_call.1} parent=1 // pred_check
      _
    $region164: #{tpu_custom_call.1} parent=1 // pred_check_branch
      %271 = sbr.rel (0) target = $region166
    $region165: #{tpu_custom_call.1} parent=1 // pred_region
      %272 = dma.done [#allocation6], 256
    $region166: #{tpu_custom_call.1} parent=1 // pred_fallthru
      _
    %273 = vsyncpa [#allocation6], 1
  %274 = vsyncmov [#allocation2]
  %s275 = vpop.sfrf %274
  %p276 = scmp.eq.s32.totalorder %s275, 0
  %p277 = pneg %p276
  %279 = shalt.err (%p277)
  %s280 = scalar_lea.sflag [#allocation2], 1
  %281 = vsyncmov %s280
  %s282 = vpop.sfrf %281
  %p283 = scmp.eq.s32.totalorder %s282, 0
  %p284 = pneg %p283
  %286 = shalt.err (%p284)
  %s287 = scalar_lea.sflag [#allocation2], 2
  %288 = vsyncmov %s287
  %s289 = vpop.sfrf %288
  %p290 = scmp.eq.s32.totalorder %s289, 0
  %p291 = pneg %p290
  %293 = shalt.err (%p291)
  %s294 = scalar_lea.sflag [#allocation2], 3
  %295 = vsyncmov %s294
  %s296 = vpop.sfrf %295
  %p297 = scmp.eq.s32.totalorder %s296, 0
  %p298 = pneg %p297
  %300 = shalt.err (%p298)
  %s301 = scalar_lea.sflag [#allocation2], 4
  %302 = vsyncmov %s301
  %s303 = vpop.sfrf %302
  %p304 = scmp.eq.s32.totalorder %s303, 0
  %p305 = pneg %p304
  %307 = shalt.err (%p305)
  %s308 = scalar_lea.sflag [#allocation2], 5
  %309 = vsyncmov %s308
  %s310 = vpop.sfrf %309
  %p311 = scmp.eq.s32.totalorder %s310, 0
  %p312 = pneg %p311
  %314 = shalt.err (%p312)
  %s315 = scalar_lea.sflag [#allocation2], 6
  %316 = vsyncmov %s315
  %s317 = vpop.sfrf %316
  %p318 = scmp.eq.s32.totalorder %s317, 0
  %p319 = pneg %p318
  %321 = shalt.err (%p319)
  %s322 = scalar_lea.sflag [#allocation2], 7
  %323 = vsyncmov %s322
  %s324 = vpop.sfrf %323
  %p325 = scmp.eq.s32.totalorder %s324, 0
  %p326 = pneg %p325
  %328 = shalt.err (%p326)

</llo_original>
